<compile_context>
chip_gen: v7x
topology: tpu7x:2x2x1
jax: 0.10.0
libtpu: 0.0.40
codegen_flags: <defaults>
</compile_context>

<pallas_src>
import functools

import jax
import jax.numpy as jnp
from jax.experimental import pallas as pl
from jax.experimental.pallas import tpu as pltpu

LANE = 128
SUBLANE = 8
BN_EPS = 1e-5


def _round_up(n, m):
    return (n + m - 1) // m * m


def _make_kernel(n_layers, compute_dtype):
    """Kernel over one (tile_b, n_features) batch tile: chain of matmul+bias(+ReLU)."""

    def kernel(*refs):
        x_ref = refs[0]
        out_ref = refs[-1]
        h = x_ref[...].astype(compute_dtype)          # per-tile cast in VMEM (no HBM pass)
        for i in range(n_layers):
            w_ref = refs[1 + 2 * i]
            b_ref = refs[2 + 2 * i]
            acc = jnp.dot(h, w_ref[...], preferred_element_type=jnp.float32)
            acc = acc + b_ref[...]                    # bias/ReLU kept on the f32 accumulator
            if i < n_layers - 1:
                acc = jnp.maximum(acc, 0.0)           # ReLU (BN already folded)
                h = acc.astype(compute_dtype)         # feed MXU in the weight dtype
            else:
                h = acc
        out_ref[...] = h.astype(out_ref.dtype)

    return kernel


def _fold_and_pad_params(params, compute_dtype):
    """Fold eval-mode BatchNorm into the preceding Linear; zero-pad hidden dims to 128."""
    weights, biases, bn = params["weights"], params["biases"], params["bn"]
    n_layers = len(weights)

    folded_w, folded_b = [], []
    for i in range(n_layers):
        w, b = weights[i], biases[i]
        if i < n_layers - 1:
            gamma, beta, mean, var = bn[i]
            scale = gamma * jax.lax.rsqrt(var + BN_EPS)
            w = w * scale[None, :]
            b = (b - mean) * scale + beta
        folded_w.append(w)
        folded_b.append(b)

    # Lane-dense hidden dims: pad W_i's N + b_i and W_{i+1}'s K with zeros.
    # Input K and final output N stay un-padded (those blocks use the full array dim,
    # which is legal for BlockSpec and avoids any wrapper-side pad/slice of x/out).
    for i in range(n_layers - 1):
        h = int(folded_w[i].shape[1])
        h_pad = _round_up(h, LANE)
        if h_pad != h:
            folded_w[i] = jnp.pad(folded_w[i], ((0, 0), (0, h_pad - h)))
            folded_b[i] = jnp.pad(folded_b[i], (0, h_pad - h))
            folded_w[i + 1] = jnp.pad(folded_w[i + 1], ((0, h_pad - h), (0, 0)))

    folded_w = [w.astype(compute_dtype) for w in folded_w]
    folded_b = [b.astype(jnp.float32).reshape(1, -1) for b in folded_b]
    return folded_w, folded_b


@functools.partial(jax.jit, static_argnames=("tile_b", "compute_dtype", "out_dtype"))
def riemann_fc_forward(x, params, *, tile_b=1024, compute_dtype=jnp.float32,
                       out_dtype=None):
    """Eval-mode forward of RiemannFullyConnected. x: (B, ...) -> (B, n_features)."""
    if out_dtype is None:
        out_dtype = compute_dtype          # bf16 config -> bf16 output stream (halves out bytes)

    B = x.shape[0]
    x2 = x.reshape(B, -1)                  # x.view(B, -1)   (no pad, no cast, no extra HBM pass)
    n_features = x2.shape[1]

    w_list, b_list = _fold_and_pad_params(params, compute_dtype)
    n_layers = len(w_list)

    # Batch tiling: sublane-aligned, no batch padding (tail block handled by OOB clipping),
    # and at least 2 grid steps so v7x megacore can shard the batch axis.
    tile_b = max(SUBLANE, _round_up(min(int(tile_b), _round_up(B, SUBLANE)), SUBLANE))
    if B > SUBLANE:
        tile_b = min(tile_b, _round_up(pl.cdiv(B, 2), SUBLANE))
    grid = (pl.cdiv(B, tile_b),)

    in_specs = [pl.BlockSpec((tile_b, n_features), lambda i: (i, 0))]
    operands = [x2]
    for w, b in zip(w_list, b_list):
        # Constant index maps: weights/biases DMA'd once, VMEM-resident across grid steps.
        in_specs.append(pl.BlockSpec(w.shape, lambda i: (0, 0)))
        in_specs.append(pl.BlockSpec(b.shape, lambda i: (0, 0)))
        operands.extend([w, b])
    out_spec = pl.BlockSpec((tile_b, n_features), lambda i: (i, 0))

    # Footprint-derived scoped-VMEM limit, valid on v5e/v6e (128 MiB) and v7x (64 MiB).
    comp_isize = jnp.dtype(compute_dtype).itemsize
    out_isize = jnp.dtype(out_dtype).itemsize
    in_isize = x2.dtype.itemsize
    max_n = max([n_features] + [int(w.shape[1]) for w in w_list])
    param_bytes = (sum(int(w.size) * comp_isize for w in w_list)
                   + sum(int(b.size) * 4 for b in b_list))
    vmem_limit = (2 * tile_b * n_features * (in_isize + out_isize)   # double-buffered x/out tiles
                  + 2 * param_bytes                                  # (double-)buffered params
                  + 2 * tile_b * max_n * (4 + comp_isize)            # f32 acc + narrow copies (slack)
                  + (8 << 20))                                       # compiler scratch headroom
    vmem_limit = int(min(max(vmem_limit, 32 << 20), 64 << 20))

    # Honest scheduling hint: single read of x, single write of out, one pass of params.
    flops = 2 * B * sum(int(w.shape[0]) * int(w.shape[1]) for w in w_list)
    bytes_accessed = int(x2.size) * in_isize + B * n_features * out_isize + param_bytes

    out = pl.pallas_call(
        _make_kernel(n_layers, compute_dtype),
        out_shape=jax.ShapeDtypeStruct((B, n_features), out_dtype),
        grid=grid,
        in_specs=in_specs,
        out_specs=out_spec,
        compiler_params=pltpu.CompilerParams(
            dimension_semantics=("parallel",),        # megacore sharding on v7x
            vmem_limit_bytes=vmem_limit,
        ),
        cost_estimate=pl.CostEstimate(
            flops=flops, transcendentals=0, bytes_accessed=bytes_accessed),
    )(*operands)

    return out


def init_params(key, n_features, hidden_sizes):
    """PyTorch-default Linear init + random (but deterministic) BN running stats."""
    dims = [n_features] + list(hidden_sizes)
    layer_sizes = list(zip(dims[:-1], dims[1:])) + [(dims[-1], n_features)]
    weights, biases, bn = [], [], []
    for li, (fan_in, fan_out) in enumerate(layer_sizes):
        key, kw, kb = jax.random.split(key, 3)
        bound = fan_in ** -0.5
        weights.append(jax.random.uniform(kw, (fan_in, fan_out), jnp.float32,
                                          minval=-bound, maxval=bound))
        biases.append(jax.random.uniform(kb, (fan_out,), jnp.float32,
                                         minval=-bound, maxval=bound))
        if li < len(layer_sizes) - 1:
            key, kg, kbeta, km, kv = jax.random.split(key, 5)
            gamma = jax.random.uniform(kg, (fan_out,), jnp.float32, minval=0.5, maxval=1.5)
            beta = jax.random.uniform(kbeta, (fan_out,), jnp.float32, minval=-0.5, maxval=0.5)
            mean = jax.random.uniform(km, (fan_out,), jnp.float32, minval=-0.5, maxval=0.5)
            var = jax.random.uniform(kv, (fan_out,), jnp.float32, minval=0.5, maxval=1.5)
            bn.append((gamma, beta, mean, var))
    return {"weights": weights, "biases": biases, "bn": bn}


def reference_forward(x, params, n_features):
    """Pure-JAX eval-mode reference matching the PyTorch module."""
    h = x.reshape(x.shape[0], -1)
    weights, biases, bn = params["weights"], params["biases"], params["bn"]
    n_layers = len(weights)
    for i in range(n_layers):
        h = h @ weights[i] + biases[i]
        if i < n_layers - 1:
            gamma, beta, mean, var = bn[i]
            h = (h - mean) / jnp.sqrt(var + BN_EPS) * gamma + beta
            h = jnp.maximum(h, 0.0)
    return h.reshape(x.shape[0], n_features)


if __name__ == "__main__":
    B = 50
    X_SHAPE = (B, 3, 40)                 # flattened -> n_features = 120
    HIDDEN_SIZES = (64, 32)

    n_features = 1
    for d in X_SHAPE[1:]:
        n_features *= d

    key = jax.random.PRNGKey(0)
    key, kx = jax.random.split(key)
    x = jax.random.normal(kx, X_SHAPE, jnp.float32)
    params = init_params(key, n_features, HIDDEN_SIZES)

    ref = reference_forward(x, params, n_features)

    # f32 path: correctness gate. tile_b=32 with B=50 -> 2-step grid with an
    # OOB-clipped tail block (exercises the un-padded batch path). Tolerance covers
    # MXU-vs-XLA default f32 matmul precision differences.
    out = riemann_fc_forward(x, params, tile_b=32, compute_dtype=jnp.float32)
    out = jax.block_until_ready(out)
    assert out.shape == (B, n_features), out.shape
    assert jnp.allclose(out, ref, atol=2e-2, rtol=2e-2), \
        float(jnp.max(jnp.abs(out - ref)))

    # bf16 weight/activation/output I/O (bandwidth config for v6e/v7x; also valid on
    # v5e since bias-add/ReLU stay on the f32 accumulator), f32 MXU accumulation.
    out_bf16 = riemann_fc_forward(x, params, tile_b=32, compute_dtype=jnp.bfloat16)
    out_bf16 = jax.block_until_ready(out_bf16)
    assert out_bf16.shape == (B, n_features)
    assert out_bf16.dtype == jnp.bfloat16
    o32 = out_bf16.astype(jnp.float32)
    assert bool(jnp.all(jnp.isfinite(o32)))
    assert jnp.allclose(o32, ref, atol=0.25, rtol=0.25)

    print("KERNEL_OK")
</pallas_src>

<mosaic_0001>
module attributes {stable_mosaic.version = 11 : i64} {
  func.func @kernel(%arg0: i32, %arg1: memref<32x120xf32, #tpu.memory_space<vmem>>, %arg2: memref<120x128xf32, #tpu.memory_space<vmem>>, %arg3: memref<1x128xf32, #tpu.memory_space<vmem>>, %arg4: memref<128x128xf32, #tpu.memory_space<vmem>>, %arg5: memref<1x128xf32, #tpu.memory_space<vmem>>, %arg6: memref<128x120xf32, #tpu.memory_space<vmem>>, %arg7: memref<1x120xf32, #tpu.memory_space<vmem>>, %arg8: memref<32x120xf32, #tpu.memory_space<vmem>>) attributes {dimension_semantics = [#tpu.dimension_semantics<parallel>], iteration_bounds = array<i64: 2>, scalar_prefetch = 0 : i64, scratch_operands = 0 : i64, tpu.core_type = #tpu.core_type<tc>, window_params = [{transform_indices = @transform_0, window_bounds = array<i64: 32, 120>}, {pipeline_mode = #tpu.pipeline_mode<synchronous>, transform_indices = @transform_1, window_bounds = array<i64: 120, 128>}, {pipeline_mode = #tpu.pipeline_mode<synchronous>, transform_indices = @transform_2, window_bounds = array<i64: 1, 128>}, {pipeline_mode = #tpu.pipeline_mode<synchronous>, transform_indices = @transform_3, window_bounds = array<i64: 128, 128>}, {pipeline_mode = #tpu.pipeline_mode<synchronous>, transform_indices = @transform_4, window_bounds = array<i64: 1, 128>}, {pipeline_mode = #tpu.pipeline_mode<synchronous>, transform_indices = @transform_5, window_bounds = array<i64: 128, 120>}, {pipeline_mode = #tpu.pipeline_mode<synchronous>, transform_indices = @transform_6, window_bounds = array<i64: 1, 120>}, {transform_indices = @transform_7, window_bounds = array<i64: 32, 120>}]} {
    %c0 = arith.constant 0 : index
    %c0_0 = arith.constant 0 : index
    %0 = vector.load %arg1[%c0, %c0_0] : memref<32x120xf32, #tpu.memory_space<vmem>>, vector<32x120xf32>
    %c0_1 = arith.constant 0 : index
    %c0_2 = arith.constant 0 : index
    %1 = vector.load %arg2[%c0_1, %c0_2] : memref<120x128xf32, #tpu.memory_space<vmem>>, vector<120x128xf32>
    %cst = arith.constant dense<0.000000e+00> : vector<32x128xf32>
    %2 = tpu.matmul %0, %1, %cst {dimension_numbers = #tpu.dot_dimension_numbers<[1], [0], [0], [1], [0, 0, 1, 1], [], []>} : vector<32x120xf32>, vector<120x128xf32>, vector<32x128xf32> -> vector<32x128xf32>
    %c0_3 = arith.constant 0 : index
    %c0_4 = arith.constant 0 : index
    %3 = vector.load %arg3[%c0_3, %c0_4] : memref<1x128xf32, #tpu.memory_space<vmem>>, vector<1x128xf32>
    %4 = vector.broadcast %3 : vector<1x128xf32> to vector<32x128xf32>
    %5 = arith.addf %2, %4 : vector<32x128xf32>
    %cst_5 = arith.constant 0.000000e+00 : f32
    %6 = vector.broadcast %cst_5 : f32 to vector<32x128xf32>
    %7 = arith.maximumf %5, %6 : vector<32x128xf32>
    %c0_6 = arith.constant 0 : index
    %c0_7 = arith.constant 0 : index
    %8 = vector.load %arg4[%c0_6, %c0_7] : memref<128x128xf32, #tpu.memory_space<vmem>>, vector<128x128xf32>
    %cst_8 = arith.constant dense<0.000000e+00> : vector<32x128xf32>
    %9 = tpu.matmul %7, %8, %cst_8 {dimension_numbers = #tpu.dot_dimension_numbers<[1], [0], [0], [1], [0, 0, 1, 1], [], []>} : vector<32x128xf32>, vector<128x128xf32>, vector<32x128xf32> -> vector<32x128xf32>
    %c0_9 = arith.constant 0 : index
    %c0_10 = arith.constant 0 : index
    %10 = vector.load %arg5[%c0_9, %c0_10] : memref<1x128xf32, #tpu.memory_space<vmem>>, vector<1x128xf32>
    %11 = vector.broadcast %10 : vector<1x128xf32> to vector<32x128xf32>
    %12 = arith.addf %9, %11 : vector<32x128xf32>
    %cst_11 = arith.constant 0.000000e+00 : f32
    %13 = vector.broadcast %cst_11 : f32 to vector<32x128xf32>
    %14 = arith.maximumf %12, %13 : vector<32x128xf32>
    %c0_12 = arith.constant 0 : index
    %c0_13 = arith.constant 0 : index
    %15 = vector.load %arg6[%c0_12, %c0_13] : memref<128x120xf32, #tpu.memory_space<vmem>>, vector<128x120xf32>
    %cst_14 = arith.constant dense<0.000000e+00> : vector<32x120xf32>
    %16 = tpu.matmul %14, %15, %cst_14 {dimension_numbers = #tpu.dot_dimension_numbers<[1], [0], [0], [1], [0, 0, 1, 1], [], []>} : vector<32x128xf32>, vector<128x120xf32>, vector<32x120xf32> -> vector<32x120xf32>
    %c0_15 = arith.constant 0 : index
    %c0_16 = arith.constant 0 : index
    %17 = vector.load %arg7[%c0_15, %c0_16] : memref<1x120xf32, #tpu.memory_space<vmem>>, vector<1x120xf32>
    %18 = vector.broadcast %17 : vector<1x120xf32> to vector<32x120xf32>
    %19 = arith.addf %16, %18 : vector<32x120xf32>
    %c0_17 = arith.constant 0 : index
    %c0_18 = arith.constant 0 : index
    %20 = vector.load %arg8[%c0_17, %c0_18] : memref<32x120xf32, #tpu.memory_space<vmem>>, vector<32x120xf32>
    tpu.vector_store %arg8[%c0_17, %c0_18], %19 {strides = array<i32>} : memref<32x120xf32, #tpu.memory_space<vmem>>, vector<32x120xf32>,
    return
  }
  func.func @transform_0(%arg0: i32) -> (i32, i32) {
    %c0_i32 = arith.constant 0 : i32
    %c0_i32_0 = arith.constant 0 : i32
    return %arg0, %c0_i32 : i32, i32
  }
  func.func @transform_1(%arg0: i32) -> (i32, i32) {
    %c0_i32 = arith.constant 0 : i32
    %c0_i32_0 = arith.constant 0 : i32
    %c0_i32_1 = arith.constant 0 : i32
    return %c0_i32, %c0_i32_0 : i32, i32
  }
  func.func @transform_2(%arg0: i32) -> (i32, i32) {
    %c0_i32 = arith.constant 0 : i32
    %c0_i32_0 = arith.constant 0 : i32
    %c0_i32_1 = arith.constant 0 : i32
    return %c0_i32, %c0_i32_0 : i32, i32
  }
  func.func @transform_3(%arg0: i32) -> (i32, i32) {
    %c0_i32 = arith.constant 0 : i32
    %c0_i32_0 = arith.constant 0 : i32
    %c0_i32_1 = arith.constant 0 : i32
    return %c0_i32, %c0_i32_0 : i32, i32
  }
  func.func @transform_4(%arg0: i32) -> (i32, i32) {
    %c0_i32 = arith.constant 0 : i32
    %c0_i32_0 = arith.constant 0 : i32
    %c0_i32_1 = arith.constant 0 : i32
    return %c0_i32, %c0_i32_0 : i32, i32
  }
  func.func @transform_5(%arg0: i32) -> (i32, i32) {
    %c0_i32 = arith.constant 0 : i32
    %c0_i32_0 = arith.constant 0 : i32
    %c0_i32_1 = arith.constant 0 : i32
    return %c0_i32, %c0_i32_0 : i32, i32
  }
  func.func @transform_6(%arg0: i32) -> (i32, i32) {
    %c0_i32 = arith.constant 0 : i32
    %c0_i32_0 = arith.constant 0 : i32
    %c0_i32_1 = arith.constant 0 : i32
    return %c0_i32, %c0_i32_0 : i32, i32
  }
  func.func @transform_7(%arg0: i32) -> (i32, i32) {
    %c0_i32 = arith.constant 0 : i32
    %c0_i32_0 = arith.constant 0 : i32
    return %arg0, %c0_i32 : i32, i32
  }
}

</mosaic_0001>

<llo_original>
// kernel: riemann_fc_forward.1
$region0: #{riemann_fc_forward.1}
  #allocation0 [shape = 'u32[]', space=smem, size = 0x4, offset = 0x4, fixed_abs, tag = 'smem constant byte address 0x4 - core index']
  #allocation1 [shape = 'u32[144,128]{1,0:T(1,128)}', space=vmem, size = 0x12000, scoped, tag = 'internal scratch']
  %s0 = inlined_call_operand.vmem [shape: f32[50,120], index: 0, kind: input, shape index: {}]
  %s1 = inlined_call_operand.vmem [shape: f32[120,128], index: 1, kind: input, shape index: {}]
  %s2 = inlined_call_operand.vmem [shape: f32[1,128], index: 2, kind: input, shape index: {}]
  %s3 = inlined_call_operand.vmem [shape: f32[128,128], index: 3, kind: input, shape index: {}]
  %s4 = inlined_call_operand.vmem [shape: f32[1,128], index: 4, kind: input, shape index: {}]
  %s5 = inlined_call_operand.vmem [shape: f32[128,120], index: 5, kind: input, shape index: {}]
  %s6 = inlined_call_operand.vmem [shape: f32[1,120], index: 6, kind: input, shape index: {}]
  %s7 = inlined_call_operand.hbm [shape: f32[50,120], index: 7, kind: output, shape index: {}]
  %s8 = sld [smem:[#allocation0]]
  $region61: #{riemann_fc_forward.1} parent=0
    _
  %s10 = ssub.s32 1, %s8
  %s11 = scalar_select 0, %s10, %s8
  $region1: #{riemann_fc_forward.1} parent=0
    #allocation2 [shape = 'u8[32768]{0}', space=vmem, size = 0x8000, scoped, tag = 'output window, operand 0']
    #allocation3 [shape = 's32[2]{0}', space=sflag, size = 0x8, scoped, tag = 'scoped memory for riemann_fc_forward.1']
    %12 = vsyncpa [#allocation3], 0
    %s13 = scalar_lea.sflag [#allocation3], 1
    %14 = vsyncpa %s13, 0
    loop: start=0, step=1, limit=4
    $region2: #{riemann_fc_forward.1} parent=1 // loop_pre_header
      _
    $region3: #{riemann_fc_forward.1} parent=1 // loop_header
      %s16 = sphi 0, %s20
      %p17 = scmp.ge.s32.totalorder %s16, 4
      %s26 = sphi 0, %s28
      %s29 = sphi 0, %s26
      %s30 = sphi 0, %s29
      %s46 = sphi 0, %s30
      %s50 = sphi 0, %s50
      %s52 = sphi 0, %s50
      %s53 = sphi 0, %s52
      %s67 = sphi 0, %s53
      %s71 = sphi 0, %s71
      %s73 = sphi 0, %s71
      %s74 = sphi 0, %s73
      %s88 = sphi 0, %s74
      %s92 = sphi 0, %s92
      %s94 = sphi 0, %s92
      %s95 = sphi 0, %s94
      %s109 = sphi 0, %s95
      %s113 = sphi 0, %s113
      %s115 = sphi 0, %s113
      %s116 = sphi 0, %s115
      %s130 = sphi 0, %s116
      %s134 = sphi 0, %s134
      %s136 = sphi 0, %s134
      %s137 = sphi 0, %s136
      %s151 = sphi 0, %s137
      %s155 = sphi 0, %s155
      %s157 = sphi 0, %s155
      %s158 = sphi 0, %s157
      %s172 = sphi 0, %s158
      %s178 = sphi 0, %s180
      %s181 = sphi 0, %s178
      %s182 = sphi 0, %s181
      %s198 = sphi 0, %s182
    $region4: #{riemann_fc_forward.1} parent=1 // loop_header_branch
      %19 = sbr.rel (%p17) target = $region8
    $region5: #{riemann_fc_forward.1} parent=1 // loop_body
      %s21 = ssub.s32 %s16, 1
      %s22 = ssub.s32 %s16, 2
      %s23 = sadd.s32 %s16, 1
      %s24 = ssub.s32 %s16, %s23
      %p25 = scmp.eq.s32.totalorder %s24, 0
      %s27 = sadd.s32 %s26, 1
      %s28 = scalar_select %p25, %s26, %s27
      %p31 = pneg %p25
      %p32 = scmp.eq.s32.totalorder %s16, 1
      %p33 = por %p31, %p32
      %p34 = scmp.ne.s32.totalorder %s26, %s29
      %p35 = scmp.eq.s32.totalorder %s16, 0
      %p36 = por %p34, %p35
      %p37 = scmp.ne.s32.totalorder %s26, %s29
      %p38 = scmp.eq.s32.totalorder %s21, 1
      %p39 = por %p37, %p38
      %p40 = scmp.ne.s32.totalorder %s29, %s30
      %p41 = scmp.eq.s32.totalorder %s21, 0
      %p42 = por %p40, %p41
      %p43 = scmp.ne.s32.totalorder %s29, %s30
      %p44 = scmp.eq.s32.totalorder %s22, 1
      %p45 = por %p43, %p44
      %p47 = scmp.ne.s32.totalorder %s30, %s46
      %p48 = scmp.eq.s32.totalorder %s22, 0
      %p49 = por %p47, %p48
      %s51 = sadd.s32 %s50, 1
      %p54 = scmp.eq.s32.totalorder %s16, 1
      %p55 = scmp.ne.s32.totalorder %s50, %s52
      %p56 = scmp.eq.s32.totalorder %s16, 0
      %p57 = por %p55, %p56
      %p58 = scmp.ne.s32.totalorder %s50, %s52
      %p59 = scmp.eq.s32.totalorder %s21, 1
      %p60 = por %p58, %p59
      %p61 = scmp.ne.s32.totalorder %s52, %s53
      %p62 = scmp.eq.s32.totalorder %s21, 0
      %p63 = por %p61, %p62
      %p64 = scmp.ne.s32.totalorder %s52, %s53
      %p65 = scmp.eq.s32.totalorder %s22, 1
      %p66 = por %p64, %p65
      %p68 = scmp.ne.s32.totalorder %s53, %s67
      %p69 = scmp.eq.s32.totalorder %s22, 0
      %p70 = por %p68, %p69
      %s72 = sadd.s32 %s71, 1
      %p75 = scmp.eq.s32.totalorder %s16, 1
      %p76 = scmp.ne.s32.totalorder %s71, %s73
      %p77 = scmp.eq.s32.totalorder %s16, 0
      %p78 = por %p76, %p77
      %p79 = scmp.ne.s32.totalorder %s71, %s73
      %p80 = scmp.eq.s32.totalorder %s21, 1
      %p81 = por %p79, %p80
      %p82 = scmp.ne.s32.totalorder %s73, %s74
      %p83 = scmp.eq.s32.totalorder %s21, 0
      %p84 = por %p82, %p83
      %p85 = scmp.ne.s32.totalorder %s73, %s74
      %p86 = scmp.eq.s32.totalorder %s22, 1
      %p87 = por %p85, %p86
      %p89 = scmp.ne.s32.totalorder %s74, %s88
      %p90 = scmp.eq.s32.totalorder %s22, 0
      %p91 = por %p89, %p90
      %s93 = sadd.s32 %s92, 1
      %p96 = scmp.eq.s32.totalorder %s16, 1
      %p97 = scmp.ne.s32.totalorder %s92, %s94
      %p98 = scmp.eq.s32.totalorder %s16, 0
      %p99 = por %p97, %p98
      %p100 = scmp.ne.s32.totalorder %s92, %s94
      %p101 = scmp.eq.s32.totalorder %s21, 1
      %p102 = por %p100, %p101
      %p103 = scmp.ne.s32.totalorder %s94, %s95
      %p104 = scmp.eq.s32.totalorder %s21, 0
      %p105 = por %p103, %p104
      %p106 = scmp.ne.s32.totalorder %s94, %s95
      %p107 = scmp.eq.s32.totalorder %s22, 1
      %p108 = por %p106, %p107
      %p110 = scmp.ne.s32.totalorder %s95, %s109
      %p111 = scmp.eq.s32.totalorder %s22, 0
      %p112 = por %p110, %p111
      %s114 = sadd.s32 %s113, 1
      %p117 = scmp.eq.s32.totalorder %s16, 1
      %p118 = scmp.ne.s32.totalorder %s113, %s115
      %p119 = scmp.eq.s32.totalorder %s16, 0
      %p120 = por %p118, %p119
      %p121 = scmp.ne.s32.totalorder %s113, %s115
      %p122 = scmp.eq.s32.totalorder %s21, 1
      %p123 = por %p121, %p122
      %p124 = scmp.ne.s32.totalorder %s115, %s116
      %p125 = scmp.eq.s32.totalorder %s21, 0
      %p126 = por %p124, %p125
      %p127 = scmp.ne.s32.totalorder %s115, %s116
      %p128 = scmp.eq.s32.totalorder %s22, 1
      %p129 = por %p127, %p128
      %p131 = scmp.ne.s32.totalorder %s116, %s130
      %p132 = scmp.eq.s32.totalorder %s22, 0
      %p133 = por %p131, %p132
      %s135 = sadd.s32 %s134, 1
      %p138 = scmp.eq.s32.totalorder %s16, 1
      %p139 = scmp.ne.s32.totalorder %s134, %s136
      %p140 = scmp.eq.s32.totalorder %s16, 0
      %p141 = por %p139, %p140
      %p142 = scmp.ne.s32.totalorder %s134, %s136
      %p143 = scmp.eq.s32.totalorder %s21, 1
      %p144 = por %p142, %p143
      %p145 = scmp.ne.s32.totalorder %s136, %s137
      %p146 = scmp.eq.s32.totalorder %s21, 0
      %p147 = por %p145, %p146
      %p148 = scmp.ne.s32.totalorder %s136, %s137
      %p149 = scmp.eq.s32.totalorder %s22, 1
      %p150 = por %p148, %p149
      %p152 = scmp.ne.s32.totalorder %s137, %s151
      %p153 = scmp.eq.s32.totalorder %s22, 0
      %p154 = por %p152, %p153
      %s156 = sadd.s32 %s155, 1
      %p159 = scmp.eq.s32.totalorder %s16, 1
      %p160 = scmp.ne.s32.totalorder %s155, %s157
      %p161 = scmp.eq.s32.totalorder %s16, 0
      %p162 = por %p160, %p161
      %p163 = scmp.ne.s32.totalorder %s155, %s157
      %p164 = scmp.eq.s32.totalorder %s21, 1
      %p165 = por %p163, %p164
      %p166 = scmp.ne.s32.totalorder %s157, %s158
      %p167 = scmp.eq.s32.totalorder %s21, 0
      %p168 = por %p166, %p167
      %p169 = scmp.ne.s32.totalorder %s157, %s158
      %p170 = scmp.eq.s32.totalorder %s22, 1
      %p171 = por %p169, %p170
      %p173 = scmp.ne.s32.totalorder %s158, %s172
      %p174 = scmp.eq.s32.totalorder %s22, 0
      %p175 = por %p173, %p174
      %s176 = ssub.s32 %s16, %s23
      %p177 = scmp.eq.s32.totalorder %s176, 0
      %s179 = sadd.s32 %s178, 1
      %s180 = scalar_select %p177, %s178, %s179
      %p183 = pneg %p177
      %p184 = scmp.eq.s32.totalorder %s16, 1
      %p185 = por %p183, %p184
      %p186 = scmp.ne.s32.totalorder %s178, %s181
      %p187 = scmp.eq.s32.totalorder %s16, 0
      %p188 = por %p186, %p187
      %p189 = scmp.ne.s32.totalorder %s178, %s181
      %p190 = scmp.eq.s32.totalorder %s21, 1
      %p191 = por %p189, %p190
      %p192 = scmp.ne.s32.totalorder %s181, %s182
      %p193 = scmp.eq.s32.totalorder %s21, 0
      %p194 = por %p192, %p193
      %p195 = scmp.ne.s32.totalorder %s181, %s182
      %p196 = scmp.eq.s32.totalorder %s22, 1
      %p197 = por %p195, %p196
      %p199 = scmp.ne.s32.totalorder %s182, %s198
      %p200 = scmp.eq.s32.totalorder %s22, 0
      %p201 = por %p199, %p200
      %p202 = scmp.le.s32.totalorder 1, %s16
      %p203 = scmp.lt.s32.totalorder %s16, 3
      %p204 = pnand %p202, %p203
      %p205 = pneg %p204
      // Predicated region
      $region9: #{riemann_fc_forward.1} parent=5 // pred_check
        _
      $region10: #{riemann_fc_forward.1} parent=5 // pred_check_branch
        %207 = sbr.rel (%p204) target = $region12
      $region11: #{riemann_fc_forward.1} parent=5 // pred_region
        %s208 = ssub.s32 %s16, 1
        // Predicated region
        $region13: #{riemann_fc_forward.1} parent=11 // pred_check
          %p209 = pneg %p63
        $region14: #{riemann_fc_forward.1} parent=11 // pred_check_branch
          %211 = sbr.rel (%p209) target = $region16
        $region15: #{riemann_fc_forward.1} parent=11 // pred_region
          _
        $region16: #{riemann_fc_forward.1} parent=11 // pred_fallthru
          _
        // Predicated region
        $region17: #{riemann_fc_forward.1} parent=11 // pred_check
          %p212 = pneg %p84
        $region18: #{riemann_fc_forward.1} parent=11 // pred_check_branch
          %214 = sbr.rel (%p212) target = $region20
        $region19: #{riemann_fc_forward.1} parent=11 // pred_region
          _
        $region20: #{riemann_fc_forward.1} parent=11 // pred_fallthru
          _
        // Predicated region
        $region21: #{riemann_fc_forward.1} parent=11 // pred_check
          %p215 = pneg %p105
        $region22: #{riemann_fc_forward.1} parent=11 // pred_check_branch
          %217 = sbr.rel (%p215) target = $region24
        $region23: #{riemann_fc_forward.1} parent=11 // pred_region
          _
        $region24: #{riemann_fc_forward.1} parent=11 // pred_fallthru
          _
        // Predicated region
        $region25: #{riemann_fc_forward.1} parent=11 // pred_check
          %p218 = pneg %p126
        $region26: #{riemann_fc_forward.1} parent=11 // pred_check_branch
          %220 = sbr.rel (%p218) target = $region28
        $region27: #{riemann_fc_forward.1} parent=11 // pred_region
          _
        $region28: #{riemann_fc_forward.1} parent=11 // pred_fallthru
          _
        // Predicated region
        $region29: #{riemann_fc_forward.1} parent=11 // pred_check
          %p221 = pneg %p147
        $region30: #{riemann_fc_forward.1} parent=11 // pred_check_branch
          %223 = sbr.rel (%p221) target = $region32
        $region31: #{riemann_fc_forward.1} parent=11 // pred_region
          _
        $region32: #{riemann_fc_forward.1} parent=11 // pred_fallthru
          _
        // Predicated region
        $region33: #{riemann_fc_forward.1} parent=11 // pred_check
          %p224 = pneg %p168
        $region34: #{riemann_fc_forward.1} parent=11 // pred_check_branch
          %226 = sbr.rel (%p224) target = $region36
        $region35: #{riemann_fc_forward.1} parent=11 // pred_region
          _
        $region36: #{riemann_fc_forward.1} parent=11 // pred_fallthru
          _
      $region12: #{riemann_fc_forward.1} parent=5 // pred_fallthru
        _
      %p227 = scmp.lt.s32.totalorder %s16, 2
      // Predicated region
      $region37: #{riemann_fc_forward.1} parent=5 // pred_check
        %p228 = pneg %p227
      $region38: #{riemann_fc_forward.1} parent=5 // pred_check_branch
        %230 = sbr.rel (%p228) target = $region40
      $region39: #{riemann_fc_forward.1} parent=5 // pred_region
        // Predicated region
        $region41: #{riemann_fc_forward.1} parent=39 // pred_check
          %p231 = pneg %p36
        $region42: #{riemann_fc_forward.1} parent=39 // pred_check_branch
          %233 = sbr.rel (%p231) target = $region44
        $region43: #{riemann_fc_forward.1} parent=39 // pred_region
          %s234 = smul.u32 4, %s16
          %s235 = ssub.s32 7, %s234
          %p236 = scmp.lt.s32.totalorder %s235, 4
          %s237 = scalar_select %p236, %s235, 4
          %s238 = smul.u32 128, %s237
          %p239 = scmp.lt.s32.totalorder %s234, 6
          %s240 = scalar_select %p239, %s234, 6
          %s241 = smul.addr %s240, 8
          %s242 = scalar_lea.vmem %s0, %s241
          %s243 = smul.u32 4, %s16
          %s244 = ssub.s32 7, %s243
          %p245 = scmp.lt.s32.totalorder %s244, 4
          %s246 = scalar_select %p245, %s244, 4
          %s247 = smul.u32 128, %s246
        $region44: #{riemann_fc_forward.1} parent=39 // pred_fallthru
          _
      $region40: #{riemann_fc_forward.1} parent=5 // pred_fallthru
        _
      %p248 = scmp.le.s32.totalorder 1, %s16
      %p249 = scmp.lt.s32.totalorder %s16, 3
      %p250 = pnand %p248, %p249
      %p251 = pneg %p250
      // Predicated region
      $region45: #{riemann_fc_forward.1} parent=5 // pred_check
        _
      $region46: #{riemann_fc_forward.1} parent=5 // pred_check_branch
        %253 = sbr.rel (%p250) target = $region48
      $region47: #{riemann_fc_forward.1} parent=5 // pred_region
        %s254 = ssub.s32 %s16, 1
        %s255 = smul.u32 4, %s21
        %s256 = ssub.s32 7, %s255
        %p257 = scmp.lt.s32.totalorder %s256, 4
        %s258 = scalar_select %p257, %s256, 4
        %s259 = smul.u32 128, %s258
        %p260 = scmp.lt.s32.totalorder %s255, 6
        %s261 = scalar_select %p260, %s255, 6
        %s262 = smul.addr %s261, 8
        %s263 = scalar_lea.vmem %s0, %s262
        %p264 = pneg %p42
        %p265 = pneg %p39
        %p266 = pneg %p63
        %p267 = pneg %p60
        %p268 = pneg %p84
        %p269 = pneg %p81
        %p270 = pneg %p105
        %p271 = pneg %p102
        %p272 = pneg %p126
        %p273 = pneg %p123
        %p274 = pneg %p147
        %p275 = pneg %p144
        %p276 = pneg %p168
        %p277 = pneg %p165
        %p278 = pneg %p194
        %p279 = pneg %p191
        %s280 = sand.u32 %s181, 1
        %s281 = scalar_lea.sflag [#allocation3], %s280
        %s282 = sand.u32 %s181, 1
        %s283 = smul.addr %s282, 32
        %s284 = scalar_lea.vmem [#allocation2], %s283
        %s285 = smul.u32 4, %s21
        %s286 = ssub.s32 7, %s285
        %p287 = scmp.lt.s32.totalorder %s286, 4
        %s288 = scalar_select %p287, %s286, 4
        %s289 = smul.u32 128, %s288
        %p290 = scmp.lt.s32.totalorder %s285, 6
        %s291 = scalar_select %p290, %s285, 6
        %s292 = smul.addr %s291, 8
        %s293 = scalar_lea.vmem %s0, %s292
        %s294 = smul.u32 4, %s21
        %s295 = ssub.s32 7, %s294
        %p296 = scmp.lt.s32.totalorder %s295, 4
        %s297 = scalar_select %p296, %s295, 4
        %s298 = smul.u32 128, %s297
        %s299 = smul.u32 4, %s21
        %s300 = ssub.s32 7, %s299
        %p301 = scmp.lt.s32.totalorder %s300, 4
        %s302 = scalar_select %p301, %s300, 4
        %s303 = smul.u32 128, %s302
        %v304 = vld [vmem:[%s293] sm:$0xff]
        %v305 = vld [vmem:[%s293 + $0x8] sm:$0xff]
        %v306 = vld [vmem:[%s293 + $0x10] sm:$0xff]
        %v307 = vld [vmem:[%s293 + $0x18] sm:$0xff]
        %v308 = vld [vmem:[%s1] sm:$0xff]
        %v309 = vld [vmem:[%s1 + $0x8] sm:$0xff]
        %v310 = vld [vmem:[%s1 + $0x10] sm:$0xff]
        %v311 = vld [vmem:[%s1 + $0x18] sm:$0xff]
        %v312 = vld [vmem:[%s1 + $0x20] sm:$0xff]
        %v313 = vld [vmem:[%s1 + $0x28] sm:$0xff]
        %v314 = vld [vmem:[%s1 + $0x30] sm:$0xff]
        %v315 = vld [vmem:[%s1 + $0x38] sm:$0xff]
        %v316 = vld [vmem:[%s1 + $0x40] sm:$0xff]
        %v317 = vld [vmem:[%s1 + $0x48] sm:$0xff]
        %v318 = vld [vmem:[%s1 + $0x50] sm:$0xff]
        %v319 = vld [vmem:[%s1 + $0x58] sm:$0xff]
        %v320 = vld [vmem:[%s1 + $0x60] sm:$0xff]
        %v321 = vld [vmem:[%s1 + $0x68] sm:$0xff]
        %v322 = vld [vmem:[%s1 + $0x70] sm:$0xff]
        %v323 = vld [vmem:[%s2] sm:$0x1]
        %v325 = vlaneseq
        %v326 = vshrl.u32 %v325, 7
        %v327 = vsub.s32 0, %v326
        %v328 = vrot.slane %v323, %v327
        %vm330 = vcmask 982016
        %v332 = vsel %vm330, %v304, 0
        %v335 = vsel %vm330, %v305, 0
        %v338 = vsel %vm330, %v306, 0
        %v341 = vsel %vm330, %v307, 0
        %343 = vmatprep.subr.mxu0 0.0
        %344 = vmatpush1.msra.mxu0 %v308
        %345 = vmatprep.subr.mxu0 0.0
        %346 = vmatpush1.msra.mxu0 %v309
        %347 = vmatprep.subr.mxu0 0.0
        %348 = vmatpush1.msra.mxu0 %v310
        %349 = vmatprep.subr.mxu0 0.0
        %350 = vmatpush1.msra.mxu0 %v311
        %351 = vmatprep.subr.mxu0 0.0
        %352 = vmatpush1.msra.mxu0 %v312
        %353 = vmatprep.subr.mxu0 0.0
        %354 = vmatpush1.msra.mxu0 %v313
        %355 = vmatprep.subr.mxu0 0.0
        %356 = vmatpush1.msra.mxu0 %v314
        %357 = vmatprep.subr.mxu0 0.0
        %358 = vmatpush1.msra.mxu0 %v315
        %359 = vmatprep.subr.mxu0 0.0
        %360 = vmatpush1.msra.mxu0 %v316
        %361 = vmatprep.subr.mxu0 0.0
        %362 = vmatpush1.msra.mxu0 %v317
        %363 = vmatprep.subr.mxu0 0.0
        %364 = vmatpush1.msra.mxu0 %v318
        %365 = vmatprep.subr.mxu0 0.0
        %366 = vmatpush1.msra.mxu0 %v319
        %367 = vmatprep.subr.mxu0 0.0
        %368 = vmatpush1.msra.mxu0 %v320
        %369 = vmatprep.subr.mxu0 0.0
        %370 = vmatpush1.msra.mxu0 %v321
        %371 = vmatprep.subr.mxu0 0.0
        %372 = vmatpush1.msra.mxu0 %v322
        %373 = vmatprep.subr.mxu0 0.0
        %374 = vmatpush1.msra.mxu0 0.0
        %375 = vmatprep.subr.mxu0 0.0
        %376 = vmatpush1.msra.mxu0 0.0
        %377 = vmatprep.subr.mxu0 0.0
        %378 = vmatpush1.msra.mxu0 0.0
        %379 = vmatprep.subr.mxu0 0.0
        %380 = vmatpush1.msra.mxu0 0.0
        %381 = vmatprep.subr.mxu0 0.0
        %382 = vmatpush1.msra.mxu0 0.0
        %383 = vmatprep.subr.mxu0 0.0
        %384 = vmatpush1.msra.mxu0 0.0
        %385 = vmatprep.subr.mxu0 0.0
        %386 = vmatpush1.msra.mxu0 0.0
        %387 = vmatprep.subr.mxu0 0.0
        %388 = vmatpush1.msra.mxu0 0.0
        %389 = vmatprep.subr.mxu0 0.0
        %390 = vmatpush1.msra.mxu0 0.0
        %391 = vmatprep.subr.mxu0 0.0
        %392 = vmatpush1.msra.mxu0 0.0
        %393 = vmatprep.subr.mxu0 0.0
        %394 = vmatpush1.msra.mxu0 0.0
        %395 = vmatprep.subr.mxu0 0.0
        %396 = vmatpush1.msra.mxu0 0.0
        %397 = vmatprep.subr.mxu0 0.0
        %398 = vmatpush1.msra.mxu0 0.0
        %399 = vmatprep.subr.mxu0 0.0
        %400 = vmatpush1.msra.mxu0 0.0
        %401 = vmatprep.subr.mxu0 0.0
        %402 = vmatpush1.msra.mxu0 0.0
        %403 = vmatprep.subr.mxu0 0.0
        %404 = vmatpush1.msra.mxu0 0.0
        %405 = vmatprep.subr.mxu0 0.0
        %406 = vmatpush1.msra.mxu0 0.0
        %407 = vmatprep.mubr.f32.mxu0 0.0
        %408 = vmatmul.mubr.f32.gmra.mrb[0].mxu0 %v332
        %v409 = vpop.f32.mrb[0].mxu0
        %v410 = vadd.f32 %v328, %v409
        %v411 = vpop.f32.mrb[0].mxu0
        %412 = vmatprep.mubr.f32.mxu0 0.0
        %413 = vmatmul.mubr.f32.gmra.mrb[0].mxu0 %v335
        %v414 = vpop.f32.mrb[0].mxu0
        %v415 = vadd.f32 %v328, %v414
        %v416 = vpop.f32.mrb[0].mxu0
        %417 = vmatprep.mubr.f32.mxu0 0.0
        %418 = vmatmul.mubr.f32.gmra.mrb[0].mxu0 %v338
        %v419 = vpop.f32.mrb[0].mxu0
        %v420 = vadd.f32 %v328, %v419
        %v421 = vpop.f32.mrb[0].mxu0
        %422 = vmatprep.mubr.f32.mxu0 0.0
        %423 = vmatmul.mubr.f32.gmra.mrb[0].mxu0 %v341
        %v424 = vpop.f32.mrb[0].mxu0
        %v425 = vadd.f32 %v328, %v424
        %v426 = vpop.f32.mrb[0].mxu0
        %427 = vdwg.mxu0
        %v428 = vmax.f32 %v410, 0.0
        %v429 = vmax.f32 %v415, 0.0
        %v430 = vmax.f32 %v420, 0.0
        %v431 = vmax.f32 %v425, 0.0
        %v432 = vld [vmem:[%s3] sm:$0xff]
        %v433 = vld [vmem:[%s3 + $0x8] sm:$0xff]
        %v434 = vld [vmem:[%s3 + $0x10] sm:$0xff]
        %v435 = vld [vmem:[%s3 + $0x18] sm:$0xff]
        %v436 = vld [vmem:[%s3 + $0x20] sm:$0xff]
        %v437 = vld [vmem:[%s3 + $0x28] sm:$0xff]
        %v438 = vld [vmem:[%s3 + $0x30] sm:$0xff]
        %v439 = vld [vmem:[%s3 + $0x38] sm:$0xff]
        %v440 = vld [vmem:[%s3 + $0x40] sm:$0xff]
        %v441 = vld [vmem:[%s3 + $0x48] sm:$0xff]
        %v442 = vld [vmem:[%s3 + $0x50] sm:$0xff]
        %v443 = vld [vmem:[%s3 + $0x58] sm:$0xff]
        %v444 = vld [vmem:[%s3 + $0x60] sm:$0xff]
        %v445 = vld [vmem:[%s3 + $0x68] sm:$0xff]
        %v446 = vld [vmem:[%s3 + $0x70] sm:$0xff]
        %v447 = vld [vmem:[%s3 + $0x78] sm:$0xff]
        %v448 = vld [vmem:[%s4] sm:$0x1]
        %v450 = vlaneseq
        %v451 = vshrl.u32 %v450, 7
        %v452 = vsub.s32 0, %v451
        %v453 = vrot.slane %v448, %v452
        %455 = vmatprep.subr.mxu0 0.0
        %456 = vmatpush1.msra.mxu0 %v432
        %457 = vmatprep.subr.mxu0 0.0
        %458 = vmatpush1.msra.mxu0 %v433
        %459 = vmatprep.subr.mxu0 0.0
        %460 = vmatpush1.msra.mxu0 %v434
        %461 = vmatprep.subr.mxu0 0.0
        %462 = vmatpush1.msra.mxu0 %v435
        %463 = vmatprep.subr.mxu0 0.0
        %464 = vmatpush1.msra.mxu0 %v436
        %465 = vmatprep.subr.mxu0 0.0
        %466 = vmatpush1.msra.mxu0 %v437
        %467 = vmatprep.subr.mxu0 0.0
        %468 = vmatpush1.msra.mxu0 %v438
        %469 = vmatprep.subr.mxu0 0.0
        %470 = vmatpush1.msra.mxu0 %v439
        %471 = vmatprep.subr.mxu0 0.0
        %472 = vmatpush1.msra.mxu0 %v440
        %473 = vmatprep.subr.mxu0 0.0
        %474 = vmatpush1.msra.mxu0 %v441
        %475 = vmatprep.subr.mxu0 0.0
        %476 = vmatpush1.msra.mxu0 %v442
        %477 = vmatprep.subr.mxu0 0.0
        %478 = vmatpush1.msra.mxu0 %v443
        %479 = vmatprep.subr.mxu0 0.0
        %480 = vmatpush1.msra.mxu0 %v444
        %481 = vmatprep.subr.mxu0 0.0
        %482 = vmatpush1.msra.mxu0 %v445
        %483 = vmatprep.subr.mxu0 0.0
        %484 = vmatpush1.msra.mxu0 %v446
        %485 = vmatprep.subr.mxu0 0.0
        %486 = vmatpush1.msra.mxu0 %v447
        %487 = vmatprep.subr.mxu0 0.0
        %488 = vmatpush1.msra.mxu0 0.0
        %489 = vmatprep.subr.mxu0 0.0
        %490 = vmatpush1.msra.mxu0 0.0
        %491 = vmatprep.subr.mxu0 0.0
        %492 = vmatpush1.msra.mxu0 0.0
        %493 = vmatprep.subr.mxu0 0.0
        %494 = vmatpush1.msra.mxu0 0.0
        %495 = vmatprep.subr.mxu0 0.0
        %496 = vmatpush1.msra.mxu0 0.0
        %497 = vmatprep.subr.mxu0 0.0
        %498 = vmatpush1.msra.mxu0 0.0
        %499 = vmatprep.subr.mxu0 0.0
        %500 = vmatpush1.msra.mxu0 0.0
        %501 = vmatprep.subr.mxu0 0.0
        %502 = vmatpush1.msra.mxu0 0.0
        %503 = vmatprep.subr.mxu0 0.0
        %504 = vmatpush1.msra.mxu0 0.0
        %505 = vmatprep.subr.mxu0 0.0
        %506 = vmatpush1.msra.mxu0 0.0
        %507 = vmatprep.subr.mxu0 0.0
        %508 = vmatpush1.msra.mxu0 0.0
        %509 = vmatprep.subr.mxu0 0.0
        %510 = vmatpush1.msra.mxu0 0.0
        %511 = vmatprep.subr.mxu0 0.0
        %512 = vmatpush1.msra.mxu0 0.0
        %513 = vmatprep.subr.mxu0 0.0
        %514 = vmatpush1.msra.mxu0 0.0
        %515 = vmatprep.subr.mxu0 0.0
        %516 = vmatpush1.msra.mxu0 0.0
        %517 = vmatprep.subr.mxu0 0.0
        %518 = vmatpush1.msra.mxu0 0.0
        %519 = vmatprep.mubr.f32.mxu0 0.0
        %520 = vmatmul.mubr.f32.gmra.mrb[0].mxu0 %v428
        %v521 = vpop.f32.mrb[0].mxu0
        %v522 = vadd.f32 %v453, %v521
        %v523 = vpop.f32.mrb[0].mxu0
        %524 = vmatprep.mubr.f32.mxu0 0.0
        %525 = vmatmul.mubr.f32.gmra.mrb[0].mxu0 %v429
        %v526 = vpop.f32.mrb[0].mxu0
        %v527 = vadd.f32 %v453, %v526
        %v528 = vpop.f32.mrb[0].mxu0
        %529 = vmatprep.mubr.f32.mxu0 0.0
        %530 = vmatmul.mubr.f32.gmra.mrb[0].mxu0 %v430
        %v531 = vpop.f32.mrb[0].mxu0
        %v532 = vadd.f32 %v453, %v531
        %v533 = vpop.f32.mrb[0].mxu0
        %534 = vmatprep.mubr.f32.mxu0 0.0
        %535 = vmatmul.mubr.f32.gmra.mrb[0].mxu0 %v431
        %v536 = vpop.f32.mrb[0].mxu0
        %v537 = vadd.f32 %v453, %v536
        %v538 = vpop.f32.mrb[0].mxu0
        %539 = vdwg.mxu0
        %v540 = vmax.f32 %v522, 0.0
        %v541 = vmax.f32 %v527, 0.0
        %v542 = vmax.f32 %v532, 0.0
        %v543 = vmax.f32 %v537, 0.0
        %v544 = vld [vmem:[%s5] sm:$0xff]
        %v545 = vld [vmem:[%s5 + $0x8] sm:$0xff]
        %v546 = vld [vmem:[%s5 + $0x10] sm:$0xff]
        %v547 = vld [vmem:[%s5 + $0x18] sm:$0xff]
        %v548 = vld [vmem:[%s5 + $0x20] sm:$0xff]
        %v549 = vld [vmem:[%s5 + $0x28] sm:$0xff]
        %v550 = vld [vmem:[%s5 + $0x30] sm:$0xff]
        %v551 = vld [vmem:[%s5 + $0x38] sm:$0xff]
        %v552 = vld [vmem:[%s5 + $0x40] sm:$0xff]
        %v553 = vld [vmem:[%s5 + $0x48] sm:$0xff]
        %v554 = vld [vmem:[%s5 + $0x50] sm:$0xff]
        %v555 = vld [vmem:[%s5 + $0x58] sm:$0xff]
        %v556 = vld [vmem:[%s5 + $0x60] sm:$0xff]
        %v557 = vld [vmem:[%s5 + $0x68] sm:$0xff]
        %v558 = vld [vmem:[%s5 + $0x70] sm:$0xff]
        %v559 = vld [vmem:[%s5 + $0x78] sm:$0xff]
        %v560 = vld [vmem:[%s6] sm:$0x1]
        %v562 = vlaneseq
        %v563 = vshrl.u32 %v562, 7
        %v564 = vsub.s32 0, %v563
        %v565 = vrot.slane %v560, %v564
        %567 = vmatprep.subr.mxu0 0.0
        %568 = vmatpush1.msra.mxu0 %v544
        %569 = vmatprep.subr.mxu0 0.0
        %570 = vmatpush1.msra.mxu0 %v545
        %571 = vmatprep.subr.mxu0 0.0
        %572 = vmatpush1.msra.mxu0 %v546
        %573 = vmatprep.subr.mxu0 0.0
        %574 = vmatpush1.msra.mxu0 %v547
        %575 = vmatprep.subr.mxu0 0.0
        %576 = vmatpush1.msra.mxu0 %v548
        %577 = vmatprep.subr.mxu0 0.0
        %578 = vmatpush1.msra.mxu0 %v549
        %579 = vmatprep.subr.mxu0 0.0
        %580 = vmatpush1.msra.mxu0 %v550
        %581 = vmatprep.subr.mxu0 0.0
        %582 = vmatpush1.msra.mxu0 %v551
        %583 = vmatprep.subr.mxu0 0.0
        %584 = vmatpush1.msra.mxu0 %v552
        %585 = vmatprep.subr.mxu0 0.0
        %586 = vmatpush1.msra.mxu0 %v553
        %587 = vmatprep.subr.mxu0 0.0
        %588 = vmatpush1.msra.mxu0 %v554
        %589 = vmatprep.subr.mxu0 0.0
        %590 = vmatpush1.msra.mxu0 %v555
        %591 = vmatprep.subr.mxu0 0.0
        %592 = vmatpush1.msra.mxu0 %v556
        %593 = vmatprep.subr.mxu0 0.0
        %594 = vmatpush1.msra.mxu0 %v557
        %595 = vmatprep.subr.mxu0 0.0
        %596 = vmatpush1.msra.mxu0 %v558
        %597 = vmatprep.subr.mxu0 0.0
        %598 = vmatpush1.msra.mxu0 %v559
        %599 = vmatprep.subr.mxu0 0.0
        %600 = vmatpush1.msra.mxu0 0.0
        %601 = vmatprep.subr.mxu0 0.0
        %602 = vmatpush1.msra.mxu0 0.0
        %603 = vmatprep.subr.mxu0 0.0
        %604 = vmatpush1.msra.mxu0 0.0
        %605 = vmatprep.subr.mxu0 0.0
        %606 = vmatpush1.msra.mxu0 0.0
        %607 = vmatprep.subr.mxu0 0.0
        %608 = vmatpush1.msra.mxu0 0.0
        %609 = vmatprep.subr.mxu0 0.0
        %610 = vmatpush1.msra.mxu0 0.0
        %611 = vmatprep.subr.mxu0 0.0
        %612 = vmatpush1.msra.mxu0 0.0
        %613 = vmatprep.subr.mxu0 0.0
        %614 = vmatpush1.msra.mxu0 0.0
        %615 = vmatprep.subr.mxu0 0.0
        %616 = vmatpush1.msra.mxu0 0.0
        %617 = vmatprep.subr.mxu0 0.0
        %618 = vmatpush1.msra.mxu0 0.0
        %619 = vmatprep.subr.mxu0 0.0
        %620 = vmatpush1.msra.mxu0 0.0
        %621 = vmatprep.subr.mxu0 0.0
        %622 = vmatpush1.msra.mxu0 0.0
        %623 = vmatprep.subr.mxu0 0.0
        %624 = vmatpush1.msra.mxu0 0.0
        %625 = vmatprep.subr.mxu0 0.0
        %626 = vmatpush1.msra.mxu0 0.0
        %627 = vmatprep.subr.mxu0 0.0
        %628 = vmatpush1.msra.mxu0 0.0
        %629 = vmatprep.subr.mxu0 0.0
        %630 = vmatpush1.msra.mxu0 0.0
        %631 = vmatprep.mubr.f32.mxu0 0.0
        %632 = vmatmul.mubr.f32.gmra.mrb[0].mxu0 %v540
        %v633 = vpop.f32.mrb[0].mxu0
        %v634 = vadd.f32 %v565, %v633
        %v635 = vpop.f32.mrb[0].mxu0
        %636 = vmatprep.mubr.f32.mxu0 0.0
        %637 = vmatmul.mubr.f32.gmra.mrb[0].mxu0 %v541
        %v638 = vpop.f32.mrb[0].mxu0
        %v639 = vadd.f32 %v565, %v638
        %v640 = vpop.f32.mrb[0].mxu0
        %641 = vmatprep.mubr.f32.mxu0 0.0
        %642 = vmatmul.mubr.f32.gmra.mrb[0].mxu0 %v542
        %v643 = vpop.f32.mrb[0].mxu0
        %v644 = vadd.f32 %v565, %v643
        %v645 = vpop.f32.mrb[0].mxu0
        %646 = vmatprep.mubr.f32.mxu0 0.0
        %647 = vmatmul.mubr.f32.gmra.mrb[0].mxu0 %v543
        %v648 = vpop.f32.mrb[0].mxu0
        %v649 = vadd.f32 %v565, %v648
        %v650 = vpop.f32.mrb[0].mxu0
        %651 = vdwg.mxu0
        %652 = vst.msk [vmem:[%s284] sm:$0xff] %vm330, %v634
        %653 = vst.msk [vmem:[%s284 + $0x8] sm:$0xff] %vm330, %v639
        %654 = vst.msk [vmem:[%s284 + $0x10] sm:$0xff] %vm330, %v644
        %655 = vst.msk [vmem:[%s284 + $0x18] sm:$0xff] %vm330, %v649
        %s656 = sand.u32 %s181, 1
        %s657 = scalar_lea.sflag [#allocation3], %s656
        %s658 = sand.u32 %s181, 1
        %s659 = smul.addr %s658, 32
        %s660 = scalar_lea.vmem [#allocation2], %s659
        // Predicated region
        $region49: #{riemann_fc_forward.1} parent=47 // pred_check
          %p661 = pneg %p191
        $region50: #{riemann_fc_forward.1} parent=47 // pred_check_branch
          %663 = sbr.rel (%p661) target = $region52
        $region51: #{riemann_fc_forward.1} parent=47 // pred_region
          %s664 = smul.u32 4, %s21
          %s665 = ssub.s32 7, %s664
          %p666 = scmp.lt.s32.totalorder %s665, 4
          %s667 = scalar_select %p666, %s665, 4
          %s668 = smul.u32 128, %s667
          %s670 = ssub.s32 512, %s668
          %671 = vsyncadd %s657, %s670
          %p672 = scmp.ne.s32.totalorder 0, %s668
          %s673 = smul.addr %s664, 128
          %s674 = scalar_lea.hbm %s7, %s673
          %s675 = smul.u32 8, %s667
          %s676 = sshll.u32 %s660, 4
          %s677 = int_to_ptr.vmem [resolvable:$true] %s676
          %s678 = sshll.u32 %s675, 4
          %682 = dma.vmem_to_hbm [thread:$0]  (%p672), %s677, %s678, %s674, %s657, 128, 128, 8
        $region52: #{riemann_fc_forward.1} parent=47 // pred_fallthru
          _
      $region48: #{riemann_fc_forward.1} parent=5 // pred_fallthru
        _
      %p683 = scmp.le.s32.totalorder 2, %s16
      // Predicated region
      $region53: #{riemann_fc_forward.1} parent=5 // pred_check
        %p684 = pneg %p683
      $region54: #{riemann_fc_forward.1} parent=5 // pred_check_branch
        %686 = sbr.rel (%p684) target = $region56
      $region55: #{riemann_fc_forward.1} parent=5 // pred_region
        %s687 = ssub.s32 %s16, 2
        // Predicated region
        $region57: #{riemann_fc_forward.1} parent=55 // pred_check
          %p688 = pneg %p197
        $region58: #{riemann_fc_forward.1} parent=55 // pred_check_branch
          %690 = sbr.rel (%p688) target = $region60
        $region59: #{riemann_fc_forward.1} parent=55 // pred_region
          %s691 = sand.u32 %s182, 1
          %s692 = scalar_lea.sflag [#allocation3], %s691
          %s693 = sand.u32 %s182, 1
          %s694 = smul.addr %s693, 32
          %s695 = scalar_lea.vmem [#allocation2], %s694
          %696 = dma.done %s692, 512
        $region60: #{riemann_fc_forward.1} parent=55 // pred_fallthru
          _
      $region56: #{riemann_fc_forward.1} parent=5 // pred_fallthru
        _
    $region6: #{riemann_fc_forward.1} parent=1 // loop_footer
      %s20 = sadd.s32 1, %s16
    $region7: #{riemann_fc_forward.1} parent=1 // loop_footer_branch
      %15 = sbr.rel target = $region3
    $region8: #{riemann_fc_forward.1} parent=1 // loop_exit
      _
    %697 = vsyncpa [#allocation3], 1
    %s698 = scalar_lea.sflag [#allocation3], 1
    %699 = vsyncpa %s698, 1

</llo_original>
